<compile_context>
chip_gen: v7x
topology: tpu7x:2x2x1
jax: 0.10.0
libtpu: 0.0.40
codegen_flags: <defaults>
</compile_context>

<pallas_src>
import functools
import math

import jax
import jax.numpy as jnp
from jax import lax
from jax.experimental import pallas as pl
from jax.experimental.pallas import tpu as pltpu


_BLOCK_BUDGET_BYTES = 8 * 1024 * 1024     # per input block (x2 when double-buffered)
_TARGET_BLOCK_BYTES = 2 * 1024 * 1024     # don't shrink row blocks far below this
_VMEM_LIMIT_BYTES = 48 * 1024 * 1024      # fits v7x's 64 MiB physical VMEM
_SMALL_FALLBACK_BYTES = 1 * 1024 * 1024   # tiny inputs: XLA reduce is cheaper


def _cdiv(a, b):
    return -(-a // b)


def _round_up(x, m):
    return _cdiv(x, m) * m


def _round_down(x, m):
    return (x // m) * m


def _pick_tiles(M, K, itemsize):
    """Row / reduction tile sizes obeying the (sublane, 128) layout rules.

    Policy: prefer TK == K (one contiguous block per row tile) and size TM to
    the VMEM budget; only tile K when even the minimum sublane-height row block
    times K blows the budget.
    """
    sublane = max(8, 32 // itemsize)        # 8 f32 / 16 bf16 / 32 int8
    row_bytes = max(K * itemsize, 1)

    if min(M, sublane) * row_bytes <= _BLOCK_BUDGET_BYTES:
        # ---- preferred: whole reduction axis in one contiguous block -------
        rows_cap = max(_round_down(_BLOCK_BUDGET_BYTES // row_bytes, sublane),
                       sublane)
        total = M * row_bytes
        # >= 2 row blocks whenever M permits (v7x megacore), up to 8 as long
        # as blocks stay around _TARGET_BLOCK_BYTES.
        want_blocks = max(2, min(8, total // _TARGET_BLOCK_BYTES))
        tm_split = _round_up(_cdiv(M, want_blocks), sublane)
        TM = min(M, rows_cap, tm_split)     # multiple of sublane, or == M
        return TM, K

    # ---- fallback (huge K): min-height row block, lane-aligned K slices ----
    TM = min(M, sublane)
    TK = _round_down(_BLOCK_BUDGET_BYTES // (TM * itemsize), 128)
    TK = max(min(TK, K), 128)
    return TM, TK


def _full_k_kernel(x_ref, o_ref):
    # One contiguous (TM, K) block per grid step: VPU tree-max across lane
    # groups + a single cross-lane (XLU) reduce, then one narrow store.
    o_ref[...] = jnp.max(x_ref[...], axis=-1, keepdims=True)


def _make_tiled_kernel(K, TK, init_val):
    """Huge-K fallback: running max accumulated in the resident output block."""
    rem = K % TK
    needs_mask = rem != 0

    def kernel(x_ref, o_ref):
        k = pl.program_id(1)

        @pl.when(k == 0)
        def _init():
            o_ref[...] = jnp.full(o_ref.shape, init_val, dtype=o_ref.dtype)

        def update(x):
            o_ref[...] = jnp.maximum(o_ref[...],
                                     jnp.max(x, axis=-1, keepdims=True))

        if needs_mask:
            last = pl.num_programs(1) - 1

            @pl.when(k == last)
            def _ragged():
                # Out-of-bounds lanes of the last K tile hold garbage; mask
                # them with the identity element of max using a cheap (1, TK)
                # lane iota broadcast over the rows.
                lane = lax.broadcasted_iota(jnp.int32, (1, TK), 1)
                fill = jnp.array(init_val, dtype=x_ref.dtype)
                update(jnp.where(lane < rem, x_ref[...], fill))

            @pl.when(k != last)
            def _full():
                update(x_ref[...])
        else:
            update(x_ref[...])

    return kernel


@functools.partial(jax.jit,
                   static_argnames=("dim", "keepdim", "_force_tiles",
                                    "_min_pallas_bytes"))
def max_pool(feat, dim, keepdim=False, *, _force_tiles=None,
             _min_pallas_bytes=_SMALL_FALLBACK_BYTES):
    """Equivalent of torch.max(feat, dim=dim, keepdim=keepdim)[0]."""
    ndim = feat.ndim
    dim = dim % ndim
    dtype = feat.dtype

    if jnp.issubdtype(dtype, jnp.floating):
        init_val = -jnp.inf
    elif jnp.issubdtype(dtype, jnp.integer):
        init_val = int(jnp.iinfo(dtype).min)
    else:
        # TODO(synk): bool / exotic dtypes fall back to XLA's reduce.
        return jnp.max(feat, axis=dim, keepdims=keepdim)

    itemsize = jnp.dtype(dtype).itemsize
    if _force_tiles is None and feat.size * itemsize < _min_pallas_bytes:
        # Fixed pallas_call dispatch + per-step overhead dominates tiny tensors.
        return jnp.max(feat, axis=dim, keepdims=keepdim)

    # --- glue ----------------------------------------------------------------
    # Hot path is dim == last (canonical pccls MaxPool(dim=2) on (B, C, N)).
    # TODO(synk): dim != last pays a full XLA transpose (extra HBM pass).
    x = feat if dim == ndim - 1 else jnp.moveaxis(feat, dim, -1)
    lead_shape = x.shape[:-1]
    K = x.shape[-1]
    M = math.prod(lead_shape) if lead_shape else 1
    x2 = x.reshape(M, K)   # contiguous reshape: no extra HBM pass

    if _force_tiles is None:
        TM, TK = _pick_tiles(M, K, itemsize)
    else:
        TM, TK = _force_tiles
        TM = min(TM, M)
        TK = min(TK, K)

    common = dict(
        out_shape=jax.ShapeDtypeStruct((M, 1), dtype),
        cost_estimate=pl.CostEstimate(
            flops=M * K,
            transcendentals=0,
            bytes_accessed=M * K * itemsize + M * itemsize),
    )

    if TK >= K:
        # Preferred: whole reduction axis per block, 1-D "parallel" row grid.
        out2 = pl.pallas_call(
            _full_k_kernel,
            grid_spec=pltpu.PrefetchScalarGridSpec(
                num_scalar_prefetch=0,
                grid=(pl.cdiv(M, TM),),
                in_specs=[pl.BlockSpec((TM, K), lambda i: (i, 0))],
                out_specs=pl.BlockSpec((TM, 1), lambda i: (i, 0)),
            ),
            compiler_params=pltpu.CompilerParams(
                dimension_semantics=("parallel",),
                vmem_limit_bytes=_VMEM_LIMIT_BYTES,
            ),
            **common,
        )(x2)
    else:
        # Huge-K fallback: K grid axis last ("arbitrary"), running max in the
        # resident (TM, 1) output block; ragged K tile masked with -inf/int-min.
        out2 = pl.pallas_call(
            _make_tiled_kernel(K, TK, init_val),
            grid_spec=pltpu.PrefetchScalarGridSpec(
                num_scalar_prefetch=0,
                grid=(pl.cdiv(M, TM), pl.cdiv(K, TK)),
                in_specs=[pl.BlockSpec((TM, TK), lambda i, k: (i, k))],
                out_specs=pl.BlockSpec((TM, 1), lambda i, k: (i, 0)),
            ),
            compiler_params=pltpu.CompilerParams(
                dimension_semantics=("parallel", "arbitrary"),
                vmem_limit_bytes=_VMEM_LIMIT_BYTES,
            ),
            **common,
        )(x2)

    res = out2[:, 0].reshape(lead_shape)
    if keepdim:
        res = jnp.expand_dims(res, dim)
    return res


if __name__ == "__main__":
    key = jax.random.PRNGKey(0)

    # Canonical pccls usage: (batch=2, channels=4, points=16), reduce points.
    # Forced through the Pallas path (the default small-input fallback would
    # otherwise handle such a tiny tensor).
    feat = jax.random.normal(key, (2, 4, 16), dtype=jnp.float32)
    out = max_pool(feat, 2, False, _min_pallas_bytes=0)
    jax.block_until_ready(out)
    ref = jnp.max(feat, axis=2)
    assert out.shape == ref.shape and out.dtype == ref.dtype
    assert jnp.array_equal(out, ref), "mismatch vs reference (dim=2)"

    # Default-threshold call exercises the small-input XLA fallback.
    out_f = max_pool(feat, 2, False)
    jax.block_until_ready(out_f)
    assert jnp.array_equal(out_f, ref)

    # keepdim=True path.
    out_k = max_pool(feat, 2, True, _min_pallas_bytes=0)
    jax.block_until_ready(out_k)
    assert jnp.array_equal(out_k, jnp.max(feat, axis=2, keepdims=True))

    # Non-last dim + bf16 (exercises moveaxis glue and bf16 sublane packing).
    feat_b = jax.random.normal(jax.random.PRNGKey(1), (2, 4, 16),
                               dtype=jnp.bfloat16)
    out_b = max_pool(feat_b, 1, True, _min_pallas_bytes=0)
    jax.block_until_ready(out_b)
    assert jnp.array_equal(out_b, jnp.max(feat_b, axis=1, keepdims=True))

    # Medium shape on the default path: full-K contiguous blocks + >=2 row
    # blocks (megacore-shardable "parallel" axis).
    feat_m = jax.random.normal(jax.random.PRNGKey(2), (2, 32, 4096),
                               dtype=jnp.float32)
    out_m = max_pool(feat_m, 2, False)
    jax.block_until_ready(out_m)
    assert jnp.array_equal(out_m, jnp.max(feat_m, axis=2))

    # Ragged row block + tiled/masked reduction axis (forced small tiles so the
    # fallback K grid axis, -inf lane masking and partial writes all execute).
    feat_r = jax.random.normal(jax.random.PRNGKey(3), (4, 5, 300),
                               dtype=jnp.float32)
    out_r = max_pool(feat_r, 2, False, _force_tiles=(8, 128))
    jax.block_until_ready(out_r)
    assert jnp.array_equal(out_r, jnp.max(feat_r, axis=2))

    # Integer dtype through the tiled fallback (int-min masking path).
    feat_i = jax.random.randint(jax.random.PRNGKey(4), (2, 3, 200),
                                -1000, 1000, dtype=jnp.int32)
    out_i = max_pool(feat_i, 2, False, _force_tiles=(8, 128))
    jax.block_until_ready(out_i)
    assert jnp.array_equal(out_i, jnp.max(feat_i, axis=2))

    # NaN propagation: Pallas kernel agrees with jnp.max (which, like
    # torch.max, propagates NaN through lax.max).
    feat_n = feat.at[0, 1, 3].set(jnp.nan)
    out_n = max_pool(feat_n, 2, False, _min_pallas_bytes=0)
    jax.block_until_ready(out_n)
    assert jnp.array_equal(out_n, jnp.max(feat_n, axis=2), equal_nan=True)

    print("KERNEL_OK")
</pallas_src>

<mosaic_0001>
module attributes {stable_mosaic.version = 11 : i64} {
  func.func @_full_k_kernel(%arg0: i32, %arg1: memref<8x16xf32, #tpu.memory_space<vmem>>, %arg2: memref<8x1xf32, #tpu.memory_space<vmem>>) attributes {dimension_semantics = [#tpu.dimension_semantics<parallel>], iteration_bounds = array<i64: 1>, scalar_prefetch = 0 : i64, scratch_operands = 0 : i64, tpu.core_type = #tpu.core_type<tc>, window_params = [{transform_indices = @transform_0, window_bounds = array<i64: 8, 16>}, {transform_indices = @transform_1, window_bounds = array<i64: 8, 1>}]} {
    %c0 = arith.constant 0 : index
    %c0_0 = arith.constant 0 : index
    %0 = vector.load %arg1[%c0, %c0_0] : memref<8x16xf32, #tpu.memory_space<vmem>>, vector<8x16xf32>
    %cst = arith.constant dense<0xFF800000> : vector<8xf32>
    %1 = vector.multi_reduction <maximumf>, %0, %cst [1] : vector<8x16xf32> to vector<8xf32>
    %2 = vector.shape_cast %1 : vector<8xf32> to vector<8x1xf32>
    %c0_1 = arith.constant 0 : index
    %c0_2 = arith.constant 0 : index
    %3 = vector.load %arg2[%c0_1, %c0_2] : memref<8x1xf32, #tpu.memory_space<vmem>>, vector<8x1xf32>
    tpu.vector_store %arg2[%c0_1, %c0_2], %2 {strides = array<i32>} : memref<8x1xf32, #tpu.memory_space<vmem>>, vector<8x1xf32>,
    return
  }
  func.func @transform_0(%arg0: i32) -> (i32, i32) {
    %c0_i32 = arith.constant 0 : i32
    %c0_i32_0 = arith.constant 0 : i32
    return %arg0, %c0_i32 : i32, i32
  }
  func.func @transform_1(%arg0: i32) -> (i32, i32) {
    %c0_i32 = arith.constant 0 : i32
    %c0_i32_0 = arith.constant 0 : i32
    return %arg0, %c0_i32 : i32, i32
  }
}

</mosaic_0001>

<llo_original>
// kernel: squeeze.1
$region0: #{squeeze.1}
  %s0 = inlined_call_operand.vmem [shape: f32[8], index: 0, kind: input, shape index: {}]
  %s1 = inlined_call_operand.hbm [shape: f32[2,4], index: 1, kind: output, shape index: {}]
  $region1: #{squeeze.1} parent=0
    #allocation0 [shape = 'u8[1024]{0}', space=vmem, size = 0x400, scoped, tag = 'operand span for operand 1']
    #allocation1 [shape = 's32[1]{0}', space=sflag, size = 0x4, scoped, tag = 'scoped memory for squeeze.1']
    #allocation2 [shape = 'u8[4096]{0}', space=vmem, size = 0x1000, scoped, tag = 'scoped mem for output reshape']
    #allocation3 [shape = 'u8[4096]{0}', space=vmem, size = 0x1000, scoped, tag = 'scoped mem for input reshape']
    %2 = vsyncpa [#allocation1], 0
    %s4 = sshllo.u32 0, 1
    %v5 = vld [vmem:[%s0] sm:%s4]
    %6 = vst [vmem:[#allocation3] sm:%s4] %v5
    %v7 = vld [vmem:[#allocation3] sm:$0x1]
    %vm8 = vcmask 31744
    %9 = vst.msk [vmem:[#allocation2] sm:$0x1] %vm8, %v7
    %v10 = vld [vmem:[#allocation3] sm:$0x1]
    %11 = vrot.lane.b32.xlu0 %v10, 124
    %v12 = vpop.permute.xlu0 %11
    %vm13 = vcmask 31744
    %s14 = scalar_lea.vmem [#allocation2], 1
    %15 = vst.msk [vmem:[%s14] sm:$0x1] %vm13, %v12
    %s17 = sshllo.u32 0, 2
    %v19 = vld [vmem:[#allocation2] sm:%s17]
    %s20 = sshllo.u32 0, 2
    %21 = vst [vmem:[#allocation0] sm:%s20] %v19
    %s23 = ssub.s32 32, 32
    %24 = vsyncadd [#allocation1], %s23
    %s26 = sshll.u32 [#allocation0], 4
    %s27 = int_to_ptr.vmem [resolvable:$true] %s26
    %29 = dma.vmem_to_hbm [thread:$0]  %s27, 32, %s1, [#allocation1]
    %30 = dma.done [#allocation1], 32
    %31 = vsyncpa [#allocation1], 1

</llo_original>
